<compile_context>
chip_gen: v5e
topology: v5e:2x2
jax: 0.10.0
libtpu: 0.0.40
codegen_flags: <defaults>
</compile_context>

<pallas_src>
from functools import partial

import jax
import jax.numpy as jnp
from jax import lax
from jax.experimental import pallas as pl
from jax.experimental.pallas import tpu as pltpu


def _round_up(x, m):
    return ((x + m - 1) // m) * m


def _predict_kernel(x_ref, w_ref, b_ref, o_ref, acc_ref, *, binary,
                    compute_dtype):
    # x_ref: (TN, TF) native dtype   w_ref: (TF, Cp) compute_dtype
    # b_ref: (1, Cp) f32 (-inf in padded class columns)
    # o_ref: (TN, 1) int32           acc_ref: (TN, Cp) f32 scratch
    k = pl.program_id(1)

    @pl.when(k == 0)
    def _init():
        # Initialize the accumulator with the (masked) bias: saves the final
        # "+ b" pass and makes padded class columns -inf for the fused argmax.
        acc_ref[...] = jnp.broadcast_to(b_ref[...], acc_ref.shape)

    acc_ref[...] += jnp.dot(
        x_ref[...].astype(compute_dtype), w_ref[...],
        preferred_element_type=jnp.float32)

    @pl.when(k == pl.num_programs(1) - 1)
    def _finish():
        s = acc_ref[...]
        if binary:
            # Single-column decision_function -> squeeze -> strict > 0.
            idx = (s[:, 0:1] > 0.0).astype(jnp.int32)
        else:
            # First-occurrence argmax over the class (lane) axis.
            col = lax.broadcasted_iota(jnp.int32, s.shape, 1)
            m = jnp.max(s, axis=-1, keepdims=True)
            idx = jnp.min(jnp.where(s == m, col, s.shape[1]),
                          axis=-1, keepdims=True)
        o_ref[...] = idx


def prepare_linear_classifier(weights, biases, *, compute_dtype=jnp.bfloat16):
    """One-time, per-model prep (hoisted out of the per-call path):
    transpose W to (F, C), pad C to a lane multiple, cast to compute dtype,
    and pad the bias with -inf so padded classes can never win the argmax."""
    weights = jnp.asarray(weights)
    if weights.ndim == 1:                      # mirrors TorchLinearModel.__init__
        weights = weights[None]
    biases = jnp.asarray(biases).reshape(-1)
    c, f = weights.shape

    c_pad = _round_up(max(c, 1), 128)
    f_pad128 = _round_up(max(f, 1), 128)
    # Keep W fully VMEM-resident (single K step, never re-streamed per batch
    # tile) whenever it fits ~8 MiB; otherwise fall back to K tiling.
    if f_pad128 * c_pad * jnp.dtype(compute_dtype).itemsize <= (8 << 20):
        tile_f = f_pad128
    else:
        tile_f = 512
    f_pad = _round_up(f, tile_f)

    wt = jnp.zeros((f_pad, c_pad), compute_dtype).at[:f, :c].set(
        weights.T.astype(compute_dtype))
    bp = jnp.full((1, c_pad), -jnp.inf, dtype=jnp.float32).at[0, :c].set(
        biases.astype(jnp.float32))

    return dict(wt=wt, bias=bp, n_classes=int(c), n_features=int(f),
                tile_f=int(tile_f), compute_dtype=compute_dtype)


def predict_indices(x, params, *, tile_n=1024):
    """Fused (x @ W.T + b) -> argmax / >0-threshold. Returns int32 indices."""
    wt = params["wt"]
    bp = params["bias"]
    c = params["n_classes"]
    f = params["n_features"]
    tile_f = params["tile_f"]
    compute_dtype = params["compute_dtype"]
    f_pad, c_pad = wt.shape

    n = x.shape[0]
    assert x.shape[1] == f

    itemsize_x = jnp.dtype(x.dtype).itemsize

    # Row tiling: multiple of 8, bounded by N, bounded by a VMEM budget for the
    # double-buffered x block, and split into >= 2 tiles (feeds both v7x TCs).
    n_min = _round_up(n, 8)
    tile_n = min(tile_n, n_min)
    while tile_n > 8 and 2 * tile_n * tile_f * itemsize_x > (16 << 20):
        tile_n //= 2
    if n_min // tile_n < 2 and n_min >= 16:
        tile_n = _round_up(n_min // 2, 8)
    n_pad = _round_up(n, tile_n)

    # No wrapper-side cast: x streams in its native dtype and is cast in-kernel.
    # Pad only when the shape actually requires it (aligned inputs pass through).
    if (n_pad, f_pad) == (n, f):
        xp = x
    else:
        xp = jnp.zeros((n_pad, f_pad), x.dtype).at[:n, :f].set(x)

    grid = (n_pad // tile_n, f_pad // tile_f)

    vmem_est = (2 * tile_n * tile_f * itemsize_x                       # x (dbl-buf)
                + 2 * tile_f * c_pad * jnp.dtype(compute_dtype).itemsize  # W
                + 2 * c_pad * 4                                        # bias
                + 2 * tile_n * 4                                       # out
                + tile_n * c_pad * 4)                                  # acc scratch
    vmem_limit = int(min(64 << 20, max(2 * vmem_est, 16 << 20)))

    kernel = partial(_predict_kernel, binary=(c == 1),
                     compute_dtype=compute_dtype)

    idx = pl.pallas_call(
        kernel,
        out_shape=jax.ShapeDtypeStruct((n_pad, 1), jnp.int32),
        grid_spec=pltpu.PrefetchScalarGridSpec(
            num_scalar_prefetch=0,
            grid=grid,
            in_specs=[
                pl.BlockSpec((tile_n, tile_f), lambda i, k: (i, k)),
                pl.BlockSpec((tile_f, c_pad), lambda i, k: (k, 0)),
                pl.BlockSpec((1, c_pad), lambda i, k: (0, 0)),
            ],
            out_specs=pl.BlockSpec((tile_n, 1), lambda i, k: (i, 0)),
            scratch_shapes=[pltpu.VMEM((tile_n, c_pad), jnp.float32)],
        ),
        compiler_params=pltpu.CompilerParams(
            dimension_semantics=("parallel", "arbitrary"),
            vmem_limit_bytes=vmem_limit,
        ),
    )(xp, wt, bp)

    return idx[:n, 0]


def predict(x, params, classes, **kwargs):
    """Mirrors TorchLinearClassifier.predict() / forward()."""
    indices = predict_indices(x, params, **kwargs)
    # TODO(synk): class-label gather stays in plain JAX (cheap (N,) gather).
    return jnp.asarray(classes)[indices]


if __name__ == "__main__":
    key = jax.random.PRNGKey(0)
    kx, kw, kb = jax.random.split(key, 3)

    batch, features, n_classes = 16, 32, 4

    x = jax.random.normal(kx, (batch, features), dtype=jnp.float32)
    weights = jax.random.normal(kw, (n_classes, features), dtype=jnp.float32) * 0.1
    biases = jax.random.normal(kb, (n_classes,), dtype=jnp.float32) * 0.1
    classes = jnp.arange(10, 10 + n_classes, dtype=jnp.int32)  # model.classes_

    # One-time per-model prep, then the fused predict kernel.
    params = prepare_linear_classifier(weights, biases)
    preds = jax.block_until_ready(predict(x, params, classes))

    # Reference with the same bf16 quantization of the streamed operands.
    xq = x.astype(jnp.bfloat16).astype(jnp.float32)
    wq = weights.astype(jnp.bfloat16).astype(jnp.float32)
    ref_scores = xq @ wq.T + biases
    ref_preds = classes[jnp.argmax(ref_scores, axis=-1)]
    assert preds.shape == (batch,)
    assert bool(jnp.all(preds == ref_preds))

    # Binary (single output column) path: squeeze then strict > 0 threshold.
    w_bin = weights[:1]
    b_bin = biases[:1]
    classes_bin = jnp.array([7, 9], dtype=jnp.int32)
    params_bin = prepare_linear_classifier(w_bin, b_bin)
    preds_bin = jax.block_until_ready(predict(x, params_bin, classes_bin))
    ref_bin_scores = (xq @ wq[:1].T + b_bin).reshape(-1)
    ref_bin = classes_bin[(ref_bin_scores > 0).astype(jnp.int32)]
    assert preds_bin.shape == (batch,)
    assert bool(jnp.all(preds_bin == ref_bin))

    print("KERNEL_OK")
</pallas_src>

<mosaic_0001>
module attributes {stable_mosaic.version = 11 : i64} {
  func.func @_predict_kernel(%arg0: i32, %arg1: i32, %arg2: memref<8x128xf32, #tpu.memory_space<vmem>>, %arg3: memref<128x128xbf16, #tpu.memory_space<vmem>>, %arg4: memref<1x128xf32, #tpu.memory_space<vmem>>, %arg5: memref<8x1xi32, #tpu.memory_space<vmem>>, %arg6: memref<8x128xf32, #tpu.memory_space<vmem>>) attributes {dimension_semantics = [#tpu.dimension_semantics<parallel>, #tpu.dimension_semantics<arbitrary>], iteration_bounds = array<i64: 2, 1>, scalar_prefetch = 0 : i64, scratch_operands = 1 : i64, tpu.core_type = #tpu.core_type<tc>, window_params = [{transform_indices = @transform_0, window_bounds = array<i64: 8, 128>}, {transform_indices = @transform_1, window_bounds = array<i64: 128, 128>}, {pipeline_mode = #tpu.pipeline_mode<synchronous>, transform_indices = @transform_2, window_bounds = array<i64: 1, 128>}, {transform_indices = @transform_3, window_bounds = array<i64: 8, 1>}]} {
    %c0_i32 = arith.constant 0 : i32
    %0 = arith.cmpi eq, %arg1, %c0_i32 : i32
    %1 = arith.extui %0 : i1 to i32
    %c0_i32_0 = arith.constant 0 : i32
    %2 = arith.cmpi ne, %1, %c0_i32_0 : i32
    scf.if %2 {
      %c0_10 = arith.constant 0 : index
      %c0_11 = arith.constant 0 : index
      %13 = vector.load %arg4[%c0_10, %c0_11] : memref<1x128xf32, #tpu.memory_space<vmem>>, vector<1x128xf32>
      %14 = vector.shape_cast %13 : vector<1x128xf32> to vector<1x128xf32>
      %15 = vector.broadcast %14 : vector<1x128xf32> to vector<8x128xf32>
      %c0_12 = arith.constant 0 : index
      %c0_13 = arith.constant 0 : index
      %16 = vector.load %arg6[%c0_12, %c0_13] : memref<8x128xf32, #tpu.memory_space<vmem>>, vector<8x128xf32>
      tpu.vector_store %arg6[%c0_12, %c0_13], %15 {strides = array<i32>} : memref<8x128xf32, #tpu.memory_space<vmem>>, vector<8x128xf32>,
    } else {
    }
    %c0 = arith.constant 0 : index
    %c0_1 = arith.constant 0 : index
    %3 = vector.load %arg6[%c0, %c0_1] : memref<8x128xf32, #tpu.memory_space<vmem>>, vector<8x128xf32>
    %c0_2 = arith.constant 0 : index
    %c0_3 = arith.constant 0 : index
    %4 = vector.load %arg2[%c0_2, %c0_3] : memref<8x128xf32, #tpu.memory_space<vmem>>, vector<8x128xf32>
    %5 = arith.truncf %4 : vector<8x128xf32> to vector<8x128xbf16>
    %c0_4 = arith.constant 0 : index
    %c0_5 = arith.constant 0 : index
    %6 = vector.load %arg3[%c0_4, %c0_5] : memref<128x128xbf16, #tpu.memory_space<vmem>>, vector<128x128xbf16>
    %cst = arith.constant dense<0.000000e+00> : vector<8x128xf32>
    %7 = tpu.matmul %5, %6, %cst {dimension_numbers = #tpu.dot_dimension_numbers<[1], [0], [0], [1], [0, 0, 1, 1], [], []>} : vector<8x128xbf16>, vector<128x128xbf16>, vector<8x128xf32> -> vector<8x128xf32>
    %8 = arith.addf %3, %7 : vector<8x128xf32>
    %c0_6 = arith.constant 0 : index
    %c0_7 = arith.constant 0 : index
    %9 = vector.load %arg6[%c0_6, %c0_7] : memref<8x128xf32, #tpu.memory_space<vmem>>, vector<8x128xf32>
    tpu.vector_store %arg6[%c0_6, %c0_7], %8 {strides = array<i32>} : memref<8x128xf32, #tpu.memory_space<vmem>>, vector<8x128xf32>,
    %c0_i32_8 = arith.constant 0 : i32
    %10 = arith.cmpi eq, %arg1, %c0_i32_8 : i32
    %11 = arith.extui %10 : i1 to i32
    %c0_i32_9 = arith.constant 0 : i32
    %12 = arith.cmpi ne, %11, %c0_i32_9 : i32
    scf.if %12 {
      %c0_10 = arith.constant 0 : index
      %c0_11 = arith.constant 0 : index
      %13 = vector.load %arg6[%c0_10, %c0_11] : memref<8x128xf32, #tpu.memory_space<vmem>>, vector<8x128xf32>
      %14 = tpu.iota {dimensions = array<i32: 1>} : vector<8x128xi32>
      %cst_12 = arith.constant dense<0xFF800000> : vector<8xf32>
      %15 = vector.multi_reduction <maximumf>, %13, %cst_12 [1] : vector<8x128xf32> to vector<8xf32>
      %16 = vector.shape_cast %15 : vector<8xf32> to vector<8x1xf32>
      %17 = vector.broadcast %16 : vector<8x1xf32> to vector<8x128xf32>
      %18 = arith.cmpf oeq, %13, %17 : vector<8x128xf32>
      %c128_i32 = arith.constant 128 : i32
      %19 = vector.broadcast %c128_i32 : i32 to vector<8x128xi32>
      %20 = arith.select %18, %14, %19 : vector<8x128xi1>, vector<8x128xi32>
      %cst_13 = arith.constant dense<2147483647> : vector<8xi32>
      %21 = vector.multi_reduction <minsi>, %20, %cst_13 [1] : vector<8x128xi32> to vector<8xi32>
      %22 = vector.shape_cast %21 : vector<8xi32> to vector<8x1xi32>
      %c0_14 = arith.constant 0 : index
      %c0_15 = arith.constant 0 : index
      %23 = vector.load %arg5[%c0_14, %c0_15] : memref<8x1xi32, #tpu.memory_space<vmem>>, vector<8x1xi32>
      tpu.vector_store %arg5[%c0_14, %c0_15], %22 {strides = array<i32>} : memref<8x1xi32, #tpu.memory_space<vmem>>, vector<8x1xi32>,
    } else {
    }
    return
  }
  func.func @transform_0(%arg0: i32, %arg1: i32) -> (i32, i32) {
    %c0_i32 = arith.constant 0 : i32
    return %arg0, %arg1 : i32, i32
  }
  func.func @transform_1(%arg0: i32, %arg1: i32) -> (i32, i32) {
    %c0_i32 = arith.constant 0 : i32
    %c0_i32_0 = arith.constant 0 : i32
    return %arg1, %c0_i32 : i32, i32
  }
  func.func @transform_2(%arg0: i32, %arg1: i32) -> (i32, i32) {
    %c0_i32 = arith.constant 0 : i32
    %c0_i32_0 = arith.constant 0 : i32
    %c0_i32_1 = arith.constant 0 : i32
    return %c0_i32, %c0_i32_0 : i32, i32
  }
  func.func @transform_3(%arg0: i32, %arg1: i32) -> (i32, i32) {
    %c0_i32 = arith.constant 0 : i32
    %c0_i32_0 = arith.constant 0 : i32
    return %arg0, %c0_i32 : i32, i32
  }
}

</mosaic_0001>

<llo_original>
// kernel: tpu_custom_call.1
$region0: #{tpu_custom_call.1}
  #allocation0 [shape = 'u32[]', space=smem, size = 0x4, offset = 0x4, fixed_abs, tag = 'smem constant byte address 0x4 - core index']
  #allocation1 [shape = 'u32[72,128]{1,0:T(1,128)}', space=vmem, size = 0x9000, scoped, tag = 'internal scratch']
  #allocation2 [shape = 'f32[8,128]{1,0:T(8,128)}', space=vmem, size = 0x1000, scoped, tag = 'scratch operand']
  %s0 = inlined_call_operand.hbm [shape: f32[16,128], index: 0, kind: input, shape index: {}]
  %s1 = inlined_call_operand.hbm [shape: bf16[128,128], index: 1, kind: input, shape index: {}]
  %s2 = inlined_call_operand.vmem [shape: f32[1,128], index: 2, kind: input, shape index: {}]
  %s3 = inlined_call_operand.vmem [shape: s32[16,1], index: 3, kind: output, shape index: {}]
  %s4 = sld [smem:[#allocation0]]
  $region61: #{tpu_custom_call.1} parent=0
    _
  %s6 = ssub.s32 1, %s4
  %s7 = scalar_select 0, %s6, %s4
  $region1: #{tpu_custom_call.1} parent=0
    #allocation3 [shape = 'u8[8192]{0}', space=vmem, size = 0x2000, scoped, tag = 'input window, operand 0']
    #allocation4 [shape = 's32[2]{0}', space=sflag, size = 0x8, scoped, tag = 'scoped memory for tpu_custom_call.1']
    #allocation5 [shape = 'u8[32768]{0}', space=vmem, size = 0x8000, scoped, tag = 'input window, operand 1, single buffered']
    #allocation6 [shape = 's32[1]{0}', space=sflag, size = 0x4, scoped, tag = 'scoped memory for tpu_custom_call.1']
    %8 = vsyncpa [#allocation4], 0
    %s9 = scalar_lea.sflag [#allocation4], 1
    %10 = vsyncpa %s9, 0
    %11 = vsyncpa [#allocation6], 0
    loop: start=0, step=1, limit=4
    $region2: #{tpu_custom_call.1} parent=1 // loop_pre_header
      _
    $region3: #{tpu_custom_call.1} parent=1 // loop_header
      %s13 = sphi 0, %s17
      %p14 = scmp.ge.s32.totalorder %s13, 4
      %s20 = sphi 0, %s32
      %s21 = sphi 0, %s28
      %s22 = sphi 0, %s20
      %s23 = sphi 0, %s21
      %s24 = sphi 0, %s22
      %s25 = sphi 0, %s23
      %s37 = sphi 0, %s39
      %s40 = sphi 0, %s37
      %s41 = sphi 0, %s40
      %s57 = sphi 0, %s41
      %s63 = sphi 0, %s65
      %s66 = sphi 0, %s63
      %s67 = sphi 0, %s66
      %s83 = sphi 0, %s67
      %s87 = sphi 0, %s87
      %s89 = sphi 0, %s87
      %s90 = sphi 0, %s89
      %s104 = sphi 0, %s90
      %s110 = sphi 0, %s112
      %s113 = sphi 0, %s110
      %s114 = sphi 0, %s113
      %s130 = sphi 0, %s114
    $region4: #{tpu_custom_call.1} parent=1 // loop_header_branch
      %16 = sbr.rel (%p14) target = $region8
    $region5: #{tpu_custom_call.1} parent=1 // loop_body
      %s18 = ssub.s32 %s13, 1
      %s19 = ssub.s32 %s13, 2
      %s26 = sadd.s32 1, %s21
      %p27 = scmp.ge.s32.totalorder %s26, 1
      %s28 = scalar_select %p27, 0, %s26
      %s29 = sadd.s32 1, %s20
      %s30 = scalar_select %p27, %s29, %s20
      %p31 = scmp.ge.s32.totalorder %s30, 2
      %s32 = scalar_select %p31, 0, %s30
      %s33 = ssub.s32 %s20, %s32
      %s34 = ssub.s32 %s21, %s28
      %s35 = sor.u32 %s33, %s34
      %p36 = scmp.eq.s32.totalorder %s35, 0
      %s38 = sadd.s32 %s37, 1
      %s39 = scalar_select %p36, %s37, %s38
      %p42 = pneg %p36
      %p43 = scmp.eq.s32.totalorder %s13, 1
      %p44 = por %p42, %p43
      %p45 = scmp.ne.s32.totalorder %s37, %s40
      %p46 = scmp.eq.s32.totalorder %s13, 0
      %p47 = por %p45, %p46
      %p48 = scmp.ne.s32.totalorder %s37, %s40
      %p49 = scmp.eq.s32.totalorder %s18, 1
      %p50 = por %p48, %p49
      %p51 = scmp.ne.s32.totalorder %s40, %s41
      %p52 = scmp.eq.s32.totalorder %s18, 0
      %p53 = por %p51, %p52
      %p54 = scmp.ne.s32.totalorder %s40, %s41
      %p55 = scmp.eq.s32.totalorder %s19, 1
      %p56 = por %p54, %p55
      %p58 = scmp.ne.s32.totalorder %s41, %s57
      %p59 = scmp.eq.s32.totalorder %s19, 0
      %p60 = por %p58, %p59
      %s61 = ssub.s32 %s21, %s28
      %p62 = scmp.eq.s32.totalorder %s61, 0
      %s64 = sadd.s32 %s63, 1
      %s65 = scalar_select %p62, %s63, %s64
      %p68 = pneg %p62
      %p69 = scmp.eq.s32.totalorder %s13, 1
      %p70 = por %p68, %p69
      %p71 = scmp.ne.s32.totalorder %s63, %s66
      %p72 = scmp.eq.s32.totalorder %s13, 0
      %p73 = por %p71, %p72
      %p74 = scmp.ne.s32.totalorder %s63, %s66
      %p75 = scmp.eq.s32.totalorder %s18, 1
      %p76 = por %p74, %p75
      %p77 = scmp.ne.s32.totalorder %s66, %s67
      %p78 = scmp.eq.s32.totalorder %s18, 0
      %p79 = por %p77, %p78
      %p80 = scmp.ne.s32.totalorder %s66, %s67
      %p81 = scmp.eq.s32.totalorder %s19, 1
      %p82 = por %p80, %p81
      %p84 = scmp.ne.s32.totalorder %s67, %s83
      %p85 = scmp.eq.s32.totalorder %s19, 0
      %p86 = por %p84, %p85
      %s88 = sadd.s32 %s87, 1
      %p91 = scmp.eq.s32.totalorder %s13, 1
      %p92 = scmp.ne.s32.totalorder %s87, %s89
      %p93 = scmp.eq.s32.totalorder %s13, 0
      %p94 = por %p92, %p93
      %p95 = scmp.ne.s32.totalorder %s87, %s89
      %p96 = scmp.eq.s32.totalorder %s18, 1
      %p97 = por %p95, %p96
      %p98 = scmp.ne.s32.totalorder %s89, %s90
      %p99 = scmp.eq.s32.totalorder %s18, 0
      %p100 = por %p98, %p99
      %p101 = scmp.ne.s32.totalorder %s89, %s90
      %p102 = scmp.eq.s32.totalorder %s19, 1
      %p103 = por %p101, %p102
      %p105 = scmp.ne.s32.totalorder %s90, %s104
      %p106 = scmp.eq.s32.totalorder %s19, 0
      %p107 = por %p105, %p106
      %s108 = ssub.s32 %s20, %s32
      %p109 = scmp.eq.s32.totalorder %s108, 0
      %s111 = sadd.s32 %s110, 1
      %s112 = scalar_select %p109, %s110, %s111
      %p115 = pneg %p109
      %p116 = scmp.eq.s32.totalorder %s13, 1
      %p117 = por %p115, %p116
      %p118 = scmp.ne.s32.totalorder %s110, %s113
      %p119 = scmp.eq.s32.totalorder %s13, 0
      %p120 = por %p118, %p119
      %p121 = scmp.ne.s32.totalorder %s110, %s113
      %p122 = scmp.eq.s32.totalorder %s18, 1
      %p123 = por %p121, %p122
      %p124 = scmp.ne.s32.totalorder %s113, %s114
      %p125 = scmp.eq.s32.totalorder %s18, 0
      %p126 = por %p124, %p125
      %p127 = scmp.ne.s32.totalorder %s113, %s114
      %p128 = scmp.eq.s32.totalorder %s19, 1
      %p129 = por %p127, %p128
      %p131 = scmp.ne.s32.totalorder %s114, %s130
      %p132 = scmp.eq.s32.totalorder %s19, 0
      %p133 = por %p131, %p132
      %p134 = scmp.le.s32.totalorder 1, %s13
      %p135 = scmp.lt.s32.totalorder %s13, 3
      %p136 = pnand %p134, %p135
      %p137 = pneg %p136
      // Predicated region
      $region9: #{tpu_custom_call.1} parent=5 // pred_check
        _
      $region10: #{tpu_custom_call.1} parent=5 // pred_check_branch
        %139 = sbr.rel (%p136) target = $region12
      $region11: #{tpu_custom_call.1} parent=5 // pred_region
        %s140 = ssub.s32 %s13, 1
        // Predicated region
        $region13: #{tpu_custom_call.1} parent=11 // pred_check
          %p141 = pneg %p79
        $region14: #{tpu_custom_call.1} parent=11 // pred_check_branch
          %143 = sbr.rel (%p141) target = $region16
        $region15: #{tpu_custom_call.1} parent=11 // pred_region
          %s144 = smul.u32 16, %s23
          %146 = vsyncadd [#allocation6], 0
          %s147 = smul.addr %s144, 4
          %s148 = scalar_lea.hbm %s1, %s147
          %s149 = sshll.u32 %s148, 4
          %s150 = int_to_ptr.hbm [resolvable:$true] %s149
          %s151 = sshll.u32 [#allocation5], 4
          %s152 = int_to_ptr.vmem [resolvable:$true] %s151
          %157 = dma.hbm_to_vmem [thread:$0]  %s150, 1024, %s152, [#allocation6], 64, 64, 4
        $region16: #{tpu_custom_call.1} parent=11 // pred_fallthru
          _
        // Predicated region
        $region17: #{tpu_custom_call.1} parent=11 // pred_check
          %p158 = pneg %p100
        $region18: #{tpu_custom_call.1} parent=11 // pred_check_branch
          %160 = sbr.rel (%p158) target = $region20
        $region19: #{tpu_custom_call.1} parent=11 // pred_region
          _
        $region20: #{tpu_custom_call.1} parent=11 // pred_fallthru
          _
      $region12: #{tpu_custom_call.1} parent=5 // pred_fallthru
        _
      %p161 = scmp.lt.s32.totalorder %s13, 2
      // Predicated region
      $region21: #{tpu_custom_call.1} parent=5 // pred_check
        %p162 = pneg %p161
      $region22: #{tpu_custom_call.1} parent=5 // pred_check_branch
        %164 = sbr.rel (%p162) target = $region24
      $region23: #{tpu_custom_call.1} parent=5 // pred_region
        // Predicated region
        $region25: #{tpu_custom_call.1} parent=23 // pred_check
          %p165 = pneg %p47
        $region26: #{tpu_custom_call.1} parent=23 // pred_check_branch
          %167 = sbr.rel (%p165) target = $region28
        $region27: #{tpu_custom_call.1} parent=23 // pred_region
          %s168 = sand.u32 %s37, 1
          %s169 = scalar_lea.sflag [#allocation4], %s168
          %s170 = sand.u32 %s37, 1
          %s171 = smul.addr %s170, 8
          %s172 = scalar_lea.vmem [#allocation3], %s171
          %174 = vsyncadd %s169, 0
          %s175 = sadd.s32 %s21, %s20
          %s176 = smul.addr %s175, 8
          %s177 = scalar_lea.hbm %s0, %s176
          %s179 = sshll.u32 %s177, 4
          %s180 = int_to_ptr.hbm [resolvable:$true] %s179
          %s181 = sshll.u32 %s172, 4
          %s182 = int_to_ptr.vmem [resolvable:$true] %s181
          %184 = dma.hbm_to_vmem [thread:$0]  %s180, 128, %s182, %s169
        $region28: #{tpu_custom_call.1} parent=23 // pred_fallthru
          _
      $region24: #{tpu_custom_call.1} parent=5 // pred_fallthru
        _
      %p185 = scmp.le.s32.totalorder 1, %s13
      %p186 = scmp.lt.s32.totalorder %s13, 3
      %p187 = pnand %p185, %p186
      %p188 = pneg %p187
      // Predicated region
      $region29: #{tpu_custom_call.1} parent=5 // pred_check
        _
      $region30: #{tpu_custom_call.1} parent=5 // pred_check_branch
        %190 = sbr.rel (%p187) target = $region32
      $region31: #{tpu_custom_call.1} parent=5 // pred_region
        %s191 = ssub.s32 %s13, 1
        %s192 = sand.u32 %s40, 1
        %s193 = scalar_lea.sflag [#allocation4], %s192
        %s194 = sand.u32 %s40, 1
        %s195 = smul.addr %s194, 8
        %s196 = scalar_lea.vmem [#allocation3], %s195
        // Predicated region
        $region33: #{tpu_custom_call.1} parent=31 // pred_check
          %p197 = pneg %p53
        $region34: #{tpu_custom_call.1} parent=31 // pred_check_branch
          %199 = sbr.rel (%p197) target = $region36
        $region35: #{tpu_custom_call.1} parent=31 // pred_region
          %201 = dma.done %s193, 128
        $region36: #{tpu_custom_call.1} parent=31 // pred_fallthru
          _
        // Predicated region
        $region37: #{tpu_custom_call.1} parent=31 // pred_check
          %p202 = pneg %p79
        $region38: #{tpu_custom_call.1} parent=31 // pred_check_branch
          %204 = sbr.rel (%p202) target = $region40
        $region39: #{tpu_custom_call.1} parent=31 // pred_region
          %206 = dma.done [#allocation6], 1024
        $region40: #{tpu_custom_call.1} parent=31 // pred_fallthru
          _
        %s207 = sand.u32 %s40, 1
        %s208 = scalar_lea.sflag [#allocation4], %s207
        %s209 = sand.u32 %s40, 1
        %s210 = smul.addr %s209, 8
        %s211 = scalar_lea.vmem [#allocation3], %s210
        %p212 = pneg %p53
        %p213 = pneg %p50
        %p214 = pneg %p79
        %p215 = pneg %p76
        %p216 = pneg %p100
        %p217 = pneg %p97
        %p218 = pneg %p126
        %p219 = pneg %p123
        %p220 = scmp.lt.s32.totalorder %s22, 1
        %s221 = scalar_select %p220, %s22, 1
        %s222 = smul.addr %s221, 8
        %s223 = scalar_lea.vmem %s3, %s222
        %s224 = smul.u32 16, %s23
        %p225 = scmp.lt.s32.totalorder %s22, 1
        %s226 = scalar_select %p225, %s22, 1
        %s227 = smul.addr %s226, 8
        %s228 = scalar_lea.vmem %s3, %s227
        %p229 = scmp.eq.s32.totalorder %s23, 0
        // Predicated region
        $region41: #{tpu_custom_call.1} parent=31 // pred_check
          %p230 = pneg %p229
        $region42: #{tpu_custom_call.1} parent=31 // pred_check_branch
          %232 = sbr.rel (%p230) target = $region44
        $region43: #{tpu_custom_call.1} parent=31 // pred_region
          %v233 = vld [vmem:[%s2] sm:$0x1]
          %v235 = vperm.slane %v233, 0
          %237 = vst [vmem:[#allocation2] sm:$0xff] %v235
        $region44: #{tpu_custom_call.1} parent=31 // pred_fallthru
          _
        %v238 = vld [vmem:[#allocation2] sm:$0xff]
        %v239 = vld [vmem:[%s196] sm:$0xff]
        %v240 = vpack.c.bf16 %v239, %v239
        %v241 = vld [vmem:[#allocation5] sm:$0xf]
        %v242 = vld [vmem:[#allocation5 + $0x4] sm:$0xf]
        %v243 = vld [vmem:[#allocation5 + $0x8] sm:$0xf]
        %v244 = vld [vmem:[#allocation5 + $0xc] sm:$0xf]
        %v245 = vld [vmem:[#allocation5 + $0x10] sm:$0xf]
        %v246 = vld [vmem:[#allocation5 + $0x14] sm:$0xf]
        %v247 = vld [vmem:[#allocation5 + $0x18] sm:$0xf]
        %v248 = vld [vmem:[#allocation5 + $0x1c] sm:$0xf]
        %v249 = vld [vmem:[#allocation5 + $0x20] sm:$0xf]
        %v250 = vld [vmem:[#allocation5 + $0x24] sm:$0xf]
        %v251 = vld [vmem:[#allocation5 + $0x28] sm:$0xf]
        %v252 = vld [vmem:[#allocation5 + $0x2c] sm:$0xf]
        %v253 = vld [vmem:[#allocation5 + $0x30] sm:$0xf]
        %v254 = vld [vmem:[#allocation5 + $0x34] sm:$0xf]
        %v255 = vld [vmem:[#allocation5 + $0x38] sm:$0xf]
        %v256 = vld [vmem:[#allocation5 + $0x3c] sm:$0xf]
        %v273 = vunpack.c.l.b16 %v241
        %v274 = vunpack.c.l.b16 %v242
        %v275 = vunpack.c.l.b16 %v243
        %v276 = vunpack.c.l.b16 %v244
        %v277 = vunpack.c.l.b16 %v245
        %v278 = vunpack.c.l.b16 %v246
        %v279 = vunpack.c.l.b16 %v247
        %v280 = vunpack.c.l.b16 %v248
        %v281 = vunpack.c.l.b16 %v249
        %v282 = vunpack.c.l.b16 %v250
        %v283 = vunpack.c.l.b16 %v251
        %v284 = vunpack.c.l.b16 %v252
        %v285 = vunpack.c.l.b16 %v253
        %v286 = vunpack.c.l.b16 %v254
        %v287 = vunpack.c.l.b16 %v255
        %v288 = vunpack.c.l.b16 %v256
        %v289 = vpack.c.b16 %v274, %v273
        %v290 = vpack.c.b16 %v276, %v275
        %v291 = vpack.c.b16 %v278, %v277
        %v292 = vpack.c.b16 %v280, %v279
        %v293 = vpack.c.b16 %v282, %v281
        %v294 = vpack.c.b16 %v284, %v283
        %v295 = vpack.c.b16 %v286, %v285
        %v296 = vpack.c.b16 %v288, %v287
        %305 = vmatpush.bf16.msra.mxu0 %v296
        %306 = vmatpush.bf16.msra.mxu0 %v295
        %307 = vmatpush.bf16.msra.mxu0 %v294
        %308 = vmatpush.bf16.msra.mxu0 %v293
        %309 = vmatpush.bf16.msra.mxu0 %v292
        %310 = vmatpush.bf16.msra.mxu0 %v291
        %311 = vmatpush.bf16.msra.mxu0 %v290
        %312 = vmatpush.bf16.msra.mxu0 %v289
        %313 = vmatmul.bf16.gmra.mxu0 %v240
        %v314 = vpop.f32.mrf.mxu0
        %v315 = vadd.f32 0.0, %v314
        %v316 = vpop.f32.mrf.mxu0
        %317 = vdwg.mxu0
        %v318 = vadd.f32 %v238, %v315
        %319 = vst [vmem:[#allocation2] sm:$0xff] %v318
        // Predicated region
        $region45: #{tpu_custom_call.1} parent=31 // pred_check
          %p320 = pneg %p229
        $region46: #{tpu_custom_call.1} parent=31 // pred_check_branch
          %322 = sbr.rel (%p320) target = $region48
        $region47: #{tpu_custom_call.1} parent=31 // pred_region
          %v323 = vld [vmem:[#allocation2] sm:$0xff]
          %v324 = vlaneseq
          %v325 = vand.u32 %v324, 127
          %326 = vmax.xlane.f32.xlu0 %v323
          %v327 = vpop.xlane.xlu0 %326
          %vm328 = vcmp.eq.f32.partialorder %v323, %v327
          %v329 = vsel %vm328, %v325, 128
          %v330 = vand.u32 %v329, 65535
          %v331 = vshra.s32 %v329, 16
          %v332 = vcvt.s32.f32 %v330
          %v333 = vcvt.s32.f32 %v331
          %334 = vmin.xlane.f32.xlu0 %v333
          %v335 = vpop.xlane.xlu0 %334
          %vm336 = vcmp.eq.f32.partialorder %v333, %v335
          %v337 = vsel %vm336, %v332, inf
          %338 = vmin.xlane.f32.xlu0 %v337
          %v339 = vpop.xlane.xlu0 %338
          %v340 = vcvt.f32.s32 %v339
          %v341 = vcvt.f32.s32 %v335
          %v342 = vshll.u32 %v341, 16
          %v343 = vadd.s32 %v342, %v340
          %vm344 = vcmask 7168
          %345 = vst.msk [vmem:[%s228] sm:$0xff] %vm344, %v343
        $region48: #{tpu_custom_call.1} parent=31 // pred_fallthru
          _
        %p346 = scmp.lt.s32.totalorder %s22, 1
        %s347 = scalar_select %p346, %s22, 1
        %s348 = smul.addr %s347, 8
        %s349 = scalar_lea.vmem %s3, %s348
        // Predicated region
        $region49: #{tpu_custom_call.1} parent=31 // pred_check
          %p350 = pneg %p123
        $region50: #{tpu_custom_call.1} parent=31 // pred_check_branch
          %352 = sbr.rel (%p350) target = $region52
        $region51: #{tpu_custom_call.1} parent=31 // pred_region
          _
        $region52: #{tpu_custom_call.1} parent=31 // pred_fallthru
          _
      $region32: #{tpu_custom_call.1} parent=5 // pred_fallthru
        _
      %p353 = scmp.le.s32.totalorder 2, %s13
      // Predicated region
      $region53: #{tpu_custom_call.1} parent=5 // pred_check
        %p354 = pneg %p353
      $region54: #{tpu_custom_call.1} parent=5 // pred_check_branch
        %356 = sbr.rel (%p354) target = $region56
      $region55: #{tpu_custom_call.1} parent=5 // pred_region
        %s357 = ssub.s32 %s13, 2
        // Predicated region
        $region57: #{tpu_custom_call.1} parent=55 // pred_check
          %p358 = pneg %p129
        $region58: #{tpu_custom_call.1} parent=55 // pred_check_branch
          %360 = sbr.rel (%p358) target = $region60
        $region59: #{tpu_custom_call.1} parent=55 // pred_region
          %p361 = scmp.lt.s32.totalorder %s24, 1
          %s362 = scalar_select %p361, %s24, 1
          %s363 = smul.addr %s362, 8
          %s364 = scalar_lea.vmem %s3, %s363
        $region60: #{tpu_custom_call.1} parent=55 // pred_fallthru
          _
      $region56: #{tpu_custom_call.1} parent=5 // pred_fallthru
        _
    $region6: #{tpu_custom_call.1} parent=1 // loop_footer
      %s17 = sadd.s32 1, %s13
    $region7: #{tpu_custom_call.1} parent=1 // loop_footer_branch
      %12 = sbr.rel target = $region3
    $region8: #{tpu_custom_call.1} parent=1 // loop_exit
      _
    %365 = vsyncpa [#allocation4], 1
    %s366 = scalar_lea.sflag [#allocation4], 1
    %367 = vsyncpa %s366, 1
    %368 = vsyncpa [#allocation6], 1

</llo_original>
